<compile_context>
chip_gen: v7x
topology: tpu7x:2x2x1
jax: 0.10.0
libtpu: 0.0.40
codegen_flags: <defaults>
</compile_context>

<pallas_src>
import math
from functools import partial

import jax
import jax.numpy as jnp
from jax.experimental import pallas as pl
from jax.experimental.pallas import tpu as pltpu

# ArcFace defaults from the module's __init__.
S = 64.0
M = 0.5
EPS = 1e-7
COS_M = math.cos(M)
SIN_M = math.sin(M)


def _round_up(x, m):
    return -(-x // m) * m


def _vmem_capacity_bytes():
    try:
        return int(pltpu.get_tpu_info().vmem_capacity_bytes)
    except Exception:
        return 64 * 1024 * 1024          # conservative fallback (v7x per-TC VMEM)


def _default_caps():
    """(tm_max, tc_max, vmem_limit_bytes) sized per TPU generation."""
    if _vmem_capacity_bytes() >= 96 * 1024 * 1024:     # v5e / v6e: 128 MiB VMEM
        return 256, 4096, 48 * 1024 * 1024
    return 256, 2048, 40 * 1024 * 1024                 # v7x: 64 MiB per TC


def _choose_row_tile(n, sublane, tm_max):
    if n <= sublane:
        return n                                       # full-dim block (allowed)
    tm = min(_round_up(n, sublane), _round_up(tm_max, sublane))
    if pl.cdiv(n, tm) < 2:
        # Split into >= 2 row tiles so the "parallel" row axis can shard across
        # both v7x TensorCores (harmless extra grid step on 1-TC chips).
        tm = _round_up(pl.cdiv(n, 2), sublane)
    return tm


def _choose_col_tile(c, lane, tc_max):
    if c <= lane:
        return c                                       # full-dim block (allowed)
    return min(_round_up(c, lane), tc_max)


def _accumulate_tile(wf, labels, n_cols, tgt_acc, excl_acc):
    """Accumulate target cosine + excluded exp-sum for one (tm, tc) f32 tile."""
    tm, tc = wf.shape
    k = pl.program_id(1)
    col = jax.lax.broadcasted_iota(jnp.int32, (tm, tc), 1)     # fixed iota
    shifted = labels - k * tc                                  # (tm, 1) label shift
    is_target = col == shifted          # labels in [0, C) => target col is in range
    in_range = col < (n_cols - k * tc)  # masks the ragged last column tile
    exp_all = jnp.exp(S * wf)           # single EUP pass per element
    # where-selects (NOT mask multiplies): garbage/inf/NaN in masked lanes of the
    # unpadded edge block is dropped, never propagated.
    tgt_acc[...] += jnp.sum(jnp.where(is_target, wf, 0.0), axis=-1, keepdims=True)
    excl_acc[...] += jnp.sum(
        jnp.where(in_range & jnp.logical_not(is_target), exp_all, 0.0),
        axis=-1, keepdims=True)


def _finalize_rows(out_ref, tgt_acc, excl_acc):
    x = jnp.clip(tgt_acc[...], -1.0 + EPS, 1.0 - EPS)
    # numerator = s * cos(acos(x) + m) = s * (x*cos(m) - sqrt(1-x^2)*sin(m))
    numerator = S * (x * COS_M - jnp.sqrt(1.0 - x * x) * SIN_M)
    denominator = jnp.exp(numerator) + excl_acc[...]
    out_ref[...] = numerator - jnp.log(denominator)            # per-row L_i


def _arcface_kernel(wf_ref, labels_ref, out_ref, tgt_acc, excl_acc, *, n_cols):
    """grid = (row_tiles, col_tiles); the column axis is the reduction axis."""
    k = pl.program_id(1)

    @pl.when(k == 0)
    def _init():
        tgt_acc[...] = jnp.zeros_like(tgt_acc)
        excl_acc[...] = jnp.zeros_like(excl_acc)

    wf = wf_ref[...].astype(jnp.float32)             # per-tile upcast (bf16 ok)
    _accumulate_tile(wf, labels_ref[...], n_cols, tgt_acc, excl_acc)

    @pl.when(k == pl.num_programs(1) - 1)
    def _finalize():
        _finalize_rows(out_ref, tgt_acc, excl_acc)


def _arcface_fused_kernel(feat_ref, w_ref, labels_ref, out_ref, tgt_acc, excl_acc,
                          *, n_cols):
    """Same reduction, but the cosine tile is produced on the MXU in-kernel."""
    k = pl.program_id(1)

    @pl.when(k == 0)
    def _init():
        tgt_acc[...] = jnp.zeros_like(tgt_acc)
        excl_acc[...] = jnp.zeros_like(excl_acc)

    # (tm, D) x (tc, D)^T on the MXU. HIGHEST precision so the f32 reference is
    # still matched after the exp(64 * wf) amplification.
    wf = jax.lax.dot_general(
        feat_ref[...], w_ref[...], (((1,), (1,)), ((), ())),
        preferred_element_type=jnp.float32,
        precision=jax.lax.Precision.HIGHEST)
    _accumulate_tile(wf, labels_ref[...], n_cols, tgt_acc, excl_acc)

    @pl.when(k == pl.num_programs(1) - 1)
    def _finalize():
        _finalize_rows(out_ref, tgt_acc, excl_acc)


def _run_arcface(kernel, inputs, in_specs, n, tm, grid, vmem_limit):
    per_row = pl.pallas_call(
        kernel,
        out_shape=jax.ShapeDtypeStruct((n, 1), jnp.float32),
        grid_spec=pltpu.PrefetchScalarGridSpec(
            num_scalar_prefetch=0,
            grid=grid,
            in_specs=in_specs,
            out_specs=pl.BlockSpec((tm, 1), lambda i, k: (i, 0)),
            scratch_shapes=[
                pltpu.VMEM((tm, 1), jnp.float32),    # target-cosine accumulator
                pltpu.VMEM((tm, 1), jnp.float32),    # excluded exp-sum accumulator
            ],
        ),
        compiler_params=pltpu.CompilerParams(
            # Row tiles are independent (sharded across TCs on v7x); the column
            # axis is the sequential reduction.
            dimension_semantics=("parallel", "arbitrary"),
            vmem_limit_bytes=vmem_limit,
        ),
    )(*inputs)
    return -jnp.mean(per_row)            # output has exactly the N real rows


def angular_penalty_sm_loss(wf, labels, *, tm_max=None, tc_max=None):
    """ArcFace angular-penalty softmax loss (matches the module's forward).

    wf:     (N, C) cosine logits (float32 or bfloat16).
    labels: (N,) integer class ids in [0, C).
    Returns the scalar float32 loss.
    """
    n, c = wf.shape
    d_tm, d_tc, vmem_limit = _default_caps()
    tm_max = d_tm if tm_max is None else tm_max
    tc_max = d_tc if tc_max is None else tc_max

    sublane = 16 if wf.dtype == jnp.bfloat16 else 8
    tm = _choose_row_tile(n, sublane, tm_max)
    tc = _choose_col_tile(c, 128, tc_max)
    grid = (pl.cdiv(n, tm), pl.cdiv(c, tc))
    labels2d = labels.astype(jnp.int32).reshape(n, 1)

    in_specs = [
        pl.BlockSpec((tm, tc), lambda i, k: (i, k)),
        # Block index constant across the column axis -> labels stay VMEM-resident.
        pl.BlockSpec((tm, 1), lambda i, k: (i, 0)),
    ]
    return _run_arcface(partial(_arcface_kernel, n_cols=c),
                        (wf, labels2d), in_specs, n, tm, grid, vmem_limit)


def angular_penalty_sm_loss_fused(feats, weights, labels, *, normalize=True,
                                  tm_max=None, tc_max=None):
    """ArcFace loss with the upstream cosine matmul fused into the kernel: the
    (N, C) logits are never materialized in HBM. feats: (N, D), weights: (C, D)."""
    if normalize:
        feats = feats / jnp.linalg.norm(feats, axis=-1, keepdims=True)
        weights = weights / jnp.linalg.norm(weights, axis=-1, keepdims=True)
    n, d = feats.shape
    c, d2 = weights.shape
    assert d == d2, "feature dims of feats and weights must match"

    d_tm, d_tc, vmem_limit = _default_caps()
    tm_max = d_tm if tm_max is None else tm_max
    # The (tm, tc) f32 cosine tile + its exp are in-kernel intermediates; keep tc
    # modest so they fit comfortably alongside the pipelined input buffers.
    tc_max = min(d_tc, 2048) if tc_max is None else tc_max

    sublane = 16 if feats.dtype == jnp.bfloat16 else 8
    tm = _choose_row_tile(n, sublane, tm_max)
    tc = _choose_col_tile(c, 128, tc_max)
    grid = (pl.cdiv(n, tm), pl.cdiv(c, tc))
    labels2d = labels.astype(jnp.int32).reshape(n, 1)

    in_specs = [
        pl.BlockSpec((tm, d), lambda i, k: (i, 0)),   # feature tile, column-resident
        pl.BlockSpec((tc, d), lambda i, k: (k, 0)),   # streamed class-weight tiles
        pl.BlockSpec((tm, 1), lambda i, k: (i, 0)),
    ]
    return _run_arcface(partial(_arcface_fused_kernel, n_cols=c),
                        (feats, weights, labels2d), in_specs, n, tm, grid, vmem_limit)


def reference_loss(wf, labels):
    """Pure-JAX reference mirroring the PyTorch code exactly (f32)."""
    wf = wf.astype(jnp.float32)
    n, c = wf.shape
    target = wf[jnp.arange(n), labels]
    x = jnp.clip(target, -1.0 + EPS, 1.0 - EPS)
    numerator = S * jnp.cos(jnp.arccos(x) + M)
    mask = jax.nn.one_hot(labels, c, dtype=bool)
    sum_excl = jnp.sum(jnp.where(mask, 0.0, jnp.exp(S * wf)), axis=1)
    denominator = jnp.exp(numerator) + sum_excl
    L = numerator - jnp.log(denominator)
    return -jnp.mean(L)


if __name__ == "__main__":
    key = jax.random.PRNGKey(0)
    k1, k2, k3, k4, k5, k6 = jax.random.split(key, 6)

    # Small ArcFace head: cosine logits of 8 samples over 32 classes, built from
    # 64-dim unit-normalized embeddings / class weights.
    N, C, D = 8, 32, 64
    feats = jax.random.normal(k1, (N, D), dtype=jnp.float32)
    weights = jax.random.normal(k2, (C, D), dtype=jnp.float32)
    feats = feats / jnp.linalg.norm(feats, axis=-1, keepdims=True)
    weights = weights / jnp.linalg.norm(weights, axis=-1, keepdims=True)
    wf = feats @ weights.T                                     # (N, C) in [-1, 1]
    labels = jax.random.randint(k3, (N,), 0, C, dtype=jnp.int32)
    ref = jax.block_until_ready(reference_loss(wf, labels))

    loss = jax.block_until_ready(angular_penalty_sm_loss(wf, labels))
    assert jnp.allclose(loss, ref, rtol=1e-5, atol=1e-5), (loss, ref)

    # Fused variant: cosine matmul on the MXU inside the kernel, no wf in HBM.
    loss_fused = jax.block_until_ready(
        angular_penalty_sm_loss_fused(feats, weights, labels, normalize=False))
    assert jnp.allclose(loss_fused, ref, rtol=1e-4, atol=1e-3), (loss_fused, ref)

    # Multi-tile accumulation with ragged (unpadded) edges in both grid dims:
    # rows 20 -> 2 x 16-row tiles, cols 300 -> 3 x 128-col tiles, masked in-kernel.
    N2, C2 = 20, 300
    feats2 = jax.random.normal(k4, (N2, D), dtype=jnp.float32)
    weights2 = jax.random.normal(k5, (C2, D), dtype=jnp.float32)
    feats2 = feats2 / jnp.linalg.norm(feats2, axis=-1, keepdims=True)
    weights2 = weights2 / jnp.linalg.norm(weights2, axis=-1, keepdims=True)
    wf2 = feats2 @ weights2.T
    labels2 = jax.random.randint(k6, (N2,), 0, C2, dtype=jnp.int32)
    ref2 = jax.block_until_ready(reference_loss(wf2, labels2))

    loss2 = jax.block_until_ready(
        angular_penalty_sm_loss(wf2, labels2, tm_max=16, tc_max=128))
    assert jnp.allclose(loss2, ref2, rtol=1e-5, atol=1e-5), (loss2, ref2)

    loss2_fused = jax.block_until_ready(
        angular_penalty_sm_loss_fused(feats2, weights2, labels2, normalize=False,
                                      tm_max=16, tc_max=128))
    assert jnp.allclose(loss2_fused, ref2, rtol=1e-4, atol=1e-3), (loss2_fused, ref2)

    # bf16 logits in HBM (halves HBM bytes); kernel upcasts per tile, so it matches
    # an f32 reference computed from the same bf16 values.
    wf2_bf16 = wf2.astype(jnp.bfloat16)
    ref_bf16 = jax.block_until_ready(reference_loss(wf2_bf16, labels2))
    loss_bf16 = jax.block_until_ready(angular_penalty_sm_loss(wf2_bf16, labels2))
    assert jnp.allclose(loss_bf16, ref_bf16, rtol=1e-5, atol=1e-5), (loss_bf16, ref_bf16)

    # TODO(synk): the 'crossentropy' / 'sphereface' / 'cosface' loss_type branches
    # of the module are not implemented (only the arcface default).
    print("KERNEL_OK")
</pallas_src>

<mosaic_0001>
module attributes {stable_mosaic.version = 11 : i64} {
  func.func @_arcface_kernel(%arg0: i32, %arg1: i32, %arg2: memref<8x32xf32, #tpu.memory_space<vmem>>, %arg3: memref<8x1xi32, #tpu.memory_space<vmem>>, %arg4: memref<8x1xf32, #tpu.memory_space<vmem>>, %arg5: memref<8x1xf32, #tpu.memory_space<vmem>>, %arg6: memref<8x1xf32, #tpu.memory_space<vmem>>) attributes {dimension_semantics = [#tpu.dimension_semantics<parallel>, #tpu.dimension_semantics<arbitrary>], iteration_bounds = array<i64: 1, 1>, scalar_prefetch = 0 : i64, scratch_operands = 2 : i64, tpu.core_type = #tpu.core_type<tc>, window_params = [{transform_indices = @transform_0, window_bounds = array<i64: 8, 32>}, {transform_indices = @transform_1, window_bounds = array<i64: 8, 1>}, {transform_indices = @transform_2, window_bounds = array<i64: 8, 1>}]} {
    %c0_i32 = arith.constant 0 : i32
    %0 = arith.cmpi eq, %arg1, %c0_i32 : i32
    %1 = arith.extui %0 : i1 to i32
    %c0_i32_0 = arith.constant 0 : i32
    %2 = arith.cmpi ne, %1, %c0_i32_0 : i32
    scf.if %2 {
      %cst_21 = arith.constant 0.000000e+00 : f32
      %37 = vector.broadcast %cst_21 : f32 to vector<8x1xf32>
      %c0_22 = arith.constant 0 : index
      %c0_23 = arith.constant 0 : index
      %38 = vector.load %arg5[%c0_22, %c0_23] : memref<8x1xf32, #tpu.memory_space<vmem>>, vector<8x1xf32>
      tpu.vector_store %arg5[%c0_22, %c0_23], %37 {strides = array<i32>} : memref<8x1xf32, #tpu.memory_space<vmem>>, vector<8x1xf32>,
      %cst_24 = arith.constant 0.000000e+00 : f32
      %39 = vector.broadcast %cst_24 : f32 to vector<8x1xf32>
      %c0_25 = arith.constant 0 : index
      %c0_26 = arith.constant 0 : index
      %40 = vector.load %arg6[%c0_25, %c0_26] : memref<8x1xf32, #tpu.memory_space<vmem>>, vector<8x1xf32>
      tpu.vector_store %arg6[%c0_25, %c0_26], %39 {strides = array<i32>} : memref<8x1xf32, #tpu.memory_space<vmem>>, vector<8x1xf32>,
    } else {
    }
    %c0 = arith.constant 0 : index
    %c0_1 = arith.constant 0 : index
    %3 = vector.load %arg2[%c0, %c0_1] : memref<8x32xf32, #tpu.memory_space<vmem>>, vector<8x32xf32>
    %c0_2 = arith.constant 0 : index
    %c0_3 = arith.constant 0 : index
    %4 = vector.load %arg3[%c0_2, %c0_3] : memref<8x1xi32, #tpu.memory_space<vmem>>, vector<8x1xi32>
    %5 = tpu.iota {dimensions = array<i32: 1>} : vector<8x32xi32>
    %c32_i32 = arith.constant 32 : i32
    %6 = arith.muli %arg1, %c32_i32 : i32
    %7 = vector.broadcast %6 : i32 to vector<8x1xi32>
    %8 = arith.subi %4, %7 : vector<8x1xi32>
    %9 = vector.broadcast %8 : vector<8x1xi32> to vector<8x32xi32>
    %10 = arith.cmpi eq, %5, %9 : vector<8x32xi32>
    %c32_i32_4 = arith.constant 32 : i32
    %11 = arith.muli %arg1, %c32_i32_4 : i32
    %c32_i32_5 = arith.constant 32 : i32
    %12 = arith.subi %c32_i32_5, %11 : i32
    %13 = vector.broadcast %12 : i32 to vector<8x32xi32>
    %14 = arith.cmpi slt, %5, %13 : vector<8x32xi32>
    %cst = arith.constant 6.400000e+01 : f32
    %15 = vector.broadcast %cst : f32 to vector<8x32xf32>
    %16 = arith.mulf %15, %3 : vector<8x32xf32>
    %17 = math.exp %16 : vector<8x32xf32>
    %c0_6 = arith.constant 0 : index
    %c0_7 = arith.constant 0 : index
    %18 = vector.load %arg5[%c0_6, %c0_7] : memref<8x1xf32, #tpu.memory_space<vmem>>, vector<8x1xf32>
    %cst_8 = arith.constant 0.000000e+00 : f32
    %19 = vector.broadcast %cst_8 : f32 to vector<8x32xf32>
    %20 = arith.select %10, %3, %19 : vector<8x32xi1>, vector<8x32xf32>
    %cst_9 = arith.constant dense<0.000000e+00> : vector<8xf32>
    %21 = vector.multi_reduction <add>, %20, %cst_9 [1] : vector<8x32xf32> to vector<8xf32>
    %22 = vector.shape_cast %21 : vector<8xf32> to vector<8x1xf32>
    %23 = arith.addf %18, %22 : vector<8x1xf32>
    %c0_10 = arith.constant 0 : index
    %c0_11 = arith.constant 0 : index
    %24 = vector.load %arg5[%c0_10, %c0_11] : memref<8x1xf32, #tpu.memory_space<vmem>>, vector<8x1xf32>
    tpu.vector_store %arg5[%c0_10, %c0_11], %23 {strides = array<i32>} : memref<8x1xf32, #tpu.memory_space<vmem>>, vector<8x1xf32>,
    %c0_12 = arith.constant 0 : index
    %c0_13 = arith.constant 0 : index
    %25 = vector.load %arg6[%c0_12, %c0_13] : memref<8x1xf32, #tpu.memory_space<vmem>>, vector<8x1xf32>
    %cst_14 = arith.constant dense<true> : vector<8x32xi1>
    %26 = arith.xori %10, %cst_14 : vector<8x32xi1>
    %27 = arith.andi %14, %26 : vector<8x32xi1>
    %cst_15 = arith.constant 0.000000e+00 : f32
    %28 = vector.broadcast %cst_15 : f32 to vector<8x32xf32>
    %29 = arith.select %27, %17, %28 : vector<8x32xi1>, vector<8x32xf32>
    %cst_16 = arith.constant dense<0.000000e+00> : vector<8xf32>
    %30 = vector.multi_reduction <add>, %29, %cst_16 [1] : vector<8x32xf32> to vector<8xf32>
    %31 = vector.shape_cast %30 : vector<8xf32> to vector<8x1xf32>
    %32 = arith.addf %25, %31 : vector<8x1xf32>
    %c0_17 = arith.constant 0 : index
    %c0_18 = arith.constant 0 : index
    %33 = vector.load %arg6[%c0_17, %c0_18] : memref<8x1xf32, #tpu.memory_space<vmem>>, vector<8x1xf32>
    tpu.vector_store %arg6[%c0_17, %c0_18], %32 {strides = array<i32>} : memref<8x1xf32, #tpu.memory_space<vmem>>, vector<8x1xf32>,
    %c0_i32_19 = arith.constant 0 : i32
    %34 = arith.cmpi eq, %arg1, %c0_i32_19 : i32
    %35 = arith.extui %34 : i1 to i32
    %c0_i32_20 = arith.constant 0 : i32
    %36 = arith.cmpi ne, %35, %c0_i32_20 : i32
    scf.if %36 {
      %c0_21 = arith.constant 0 : index
      %c0_22 = arith.constant 0 : index
      %37 = vector.load %arg5[%c0_21, %c0_22] : memref<8x1xf32, #tpu.memory_space<vmem>>, vector<8x1xf32>
      %cst_23 = arith.constant -0.99999988 : f32
      %cst_24 = arith.constant 0.99999988 : f32
      %38 = vector.broadcast %cst_23 : f32 to vector<8x1xf32>
      %39 = arith.maximumf %38, %37 : vector<8x1xf32>
      %40 = vector.broadcast %cst_24 : f32 to vector<8x1xf32>
      %41 = arith.minimumf %40, %39 : vector<8x1xf32>
      %cst_25 = arith.constant 0.87758255 : f32
      %42 = vector.broadcast %cst_25 : f32 to vector<8x1xf32>
      %43 = arith.mulf %41, %42 : vector<8x1xf32>
      %44 = arith.mulf %41, %41 : vector<8x1xf32>
      %cst_26 = arith.constant 1.000000e+00 : f32
      %45 = vector.broadcast %cst_26 : f32 to vector<8x1xf32>
      %46 = arith.subf %45, %44 : vector<8x1xf32>
      %47 = math.sqrt %46 : vector<8x1xf32>
      %cst_27 = arith.constant 0.47942555 : f32
      %48 = vector.broadcast %cst_27 : f32 to vector<8x1xf32>
      %49 = arith.mulf %47, %48 : vector<8x1xf32>
      %50 = arith.subf %43, %49 : vector<8x1xf32>
      %cst_28 = arith.constant 6.400000e+01 : f32
      %51 = vector.broadcast %cst_28 : f32 to vector<8x1xf32>
      %52 = arith.mulf %51, %50 : vector<8x1xf32>
      %53 = math.exp %52 : vector<8x1xf32>
      %c0_29 = arith.constant 0 : index
      %c0_30 = arith.constant 0 : index
      %54 = vector.load %arg6[%c0_29, %c0_30] : memref<8x1xf32, #tpu.memory_space<vmem>>, vector<8x1xf32>
      %55 = arith.addf %53, %54 : vector<8x1xf32>
      %56 = math.log %55 : vector<8x1xf32>
      %57 = arith.subf %52, %56 : vector<8x1xf32>
      %c0_31 = arith.constant 0 : index
      %c0_32 = arith.constant 0 : index
      %58 = vector.load %arg4[%c0_31, %c0_32] : memref<8x1xf32, #tpu.memory_space<vmem>>, vector<8x1xf32>
      tpu.vector_store %arg4[%c0_31, %c0_32], %57 {strides = array<i32>} : memref<8x1xf32, #tpu.memory_space<vmem>>, vector<8x1xf32>,
    } else {
    }
    return
  }
  func.func @transform_0(%arg0: i32, %arg1: i32) -> (i32, i32) {
    %c0_i32 = arith.constant 0 : i32
    return %arg0, %arg1 : i32, i32
  }
  func.func @transform_1(%arg0: i32, %arg1: i32) -> (i32, i32) {
    %c0_i32 = arith.constant 0 : i32
    %c0_i32_0 = arith.constant 0 : i32
    return %arg0, %c0_i32 : i32, i32
  }
  func.func @transform_2(%arg0: i32, %arg1: i32) -> (i32, i32) {
    %c0_i32 = arith.constant 0 : i32
    %c0_i32_0 = arith.constant 0 : i32
    return %arg0, %c0_i32 : i32, i32
  }
}

</mosaic_0001>

<llo_original>
// kernel: tpu_custom_call.1
$region0: #{tpu_custom_call.1}
  #allocation0 [shape = 'u32[]', space=smem, size = 0x4, offset = 0x4, fixed_abs, tag = 'smem constant byte address 0x4 - core index']
  #allocation1 [shape = 'u32[144,128]{1,0:T(1,128)}', space=vmem, size = 0x12000, scoped, tag = 'internal scratch']
  #allocation2 [shape = 'f32[8,1]{1,0:T(8,128)}', space=vmem, size = 0x1000, scoped, tag = 'scratch operand']
  #allocation3 [shape = 'f32[8,1]{1,0:T(8,128)}', space=vmem, size = 0x1000, scoped, tag = 'scratch operand']
  %s0 = inlined_call_operand.vmem [shape: f32[8,32], index: 0, kind: input, shape index: {}]
  %s1 = inlined_call_operand.vmem [shape: s32[8,1], index: 1, kind: input, shape index: {}]
  %s2 = inlined_call_operand.vmem [shape: f32[8,1], index: 2, kind: output, shape index: {}]
  %s3 = sld [smem:[#allocation0]]
  $region26: #{tpu_custom_call.1} parent=0
    _
  %s5 = ssub.s32 1, %s3
  %s6 = scalar_select 0, %s5, %s3
  // Predicated region
  $region2: #{tpu_custom_call.1} parent=0 // pred_check
    _
  $region3: #{tpu_custom_call.1} parent=0 // pred_check_branch
    %8 = sbr.rel (0) target = $region5
  $region4: #{tpu_custom_call.1} parent=0 // pred_region
    _
  $region5: #{tpu_custom_call.1} parent=0 // pred_fallthru
    _
  // Predicated region
  $region6: #{tpu_custom_call.1} parent=0 // pred_check
    _
  $region7: #{tpu_custom_call.1} parent=0 // pred_check_branch
    %10 = sbr.rel (0) target = $region9
  $region8: #{tpu_custom_call.1} parent=0 // pred_region
    _
  $region9: #{tpu_custom_call.1} parent=0 // pred_fallthru
    _
  %p11 = scmp.eq.s32.totalorder 0, 0
  // Predicated region
  $region10: #{tpu_custom_call.1} parent=0 // pred_check
    %p12 = pneg %p11
  $region11: #{tpu_custom_call.1} parent=0 // pred_check_branch
    %14 = sbr.rel (%p12) target = $region13
  $region12: #{tpu_custom_call.1} parent=0 // pred_region
    %vm15 = vcmask 7168
    %16 = vst.msk [vmem:[#allocation2] sm:$0xff] %vm15, 0.0
    %17 = vst.msk [vmem:[#allocation3] sm:$0xff] %vm15, 0.0
  $region13: #{tpu_custom_call.1} parent=0 // pred_fallthru
    _
  %v18 = vld [vmem:[%s0] sm:$0xff]
  %v19 = vld [vmem:[%s1] sm:$0xff]
  %v20 = vlaneseq
  %v21 = vand.u32 %v20, 127
  %s22 = smul.u32 0, 32
  %v23 = vstv %s22
  %v24 = vsub.s32 %v19, %v23
  %25 = vset.pattern.permute.xlu0 0
  %26 = vperm.xlu0 %25, %v24
  %v27 = vpop.permute.xlu0 %26
  %vm28 = vcmp.eq.s32.totalorder %v21, %v27
  %s29 = ssub.s32 32, %s22
  %v30 = vstv %s29
  %vm31 = vcmp.lt.s32.totalorder %v21, %v30
  %v32 = vmul.f32 %v18, 64.0
  %v33 = vmul.f32 %v32, 1.442695
  %v34 = vpow.pop %v33
  %v35 = vld [vmem:[#allocation2] sm:$0xff]
  %v36 = vsel %vm28, %v18, 0.0
  %vm37 = vcmask 261120
  %v38 = vsel %vm37, %v36, 0.0
  %39 = vadd.xlane.f32.xlu0 %v38
  %v40 = vpop.xlane.xlu0 %39
  %v41 = vadd.f32 %v35, %v40
  %vm42 = vcmask 7168
  %43 = vst.msk [vmem:[#allocation2] sm:$0xff] %vm42, %v41
  %v44 = vld [vmem:[#allocation3] sm:$0xff]
  %vm45 = vmxor %vm28, 1
  %vm46 = vmand %vm31, %vm45
  %v47 = vsel %vm46, %v34, 0.0
  %v48 = vsel %vm37, %v47, 0.0
  %49 = vadd.xlane.f32.xlu0 %v48
  %v50 = vpop.xlane.xlu0 %49
  %v51 = vadd.f32 %v44, %v50
  %52 = vst.msk [vmem:[#allocation3] sm:$0xff] %vm42, %v51
  // Predicated region
  $region14: #{tpu_custom_call.1} parent=0 // pred_check
    %p53 = pneg %p11
  $region15: #{tpu_custom_call.1} parent=0 // pred_check_branch
    %55 = sbr.rel (%p53) target = $region17
  $region16: #{tpu_custom_call.1} parent=0 // pred_region
    %v56 = vld [vmem:[#allocation2] sm:$0xff]
    %v57 = vmax.f32 %v56, -0.9999999
    %v58 = vmin.f32 %v57, 0.9999999
    %v59 = vmul.f32 %v58, 0.87758255
    %v60 = vmul.f32 %v58, %v58
    %v61 = vsub.f32 1.0, %v60
    %v62 = vrsqrt.pop %v61
    %v63 = vmul.f32 %v61, %v62
    %vm64 = vcmp.eq.f32.partialorder %v61, inf
    %v65 = vsel %vm64, %v61, %v63
    %vm66 = vcmp.eq.f32.partialorder %v61, 0.0
    %v67 = vand.u32 %v61, 2147483648
    %v68 = vsel %vm66, %v67, %v65
    %v69 = vmul.f32 %v68, 0.47942555
    %v70 = vsub.f32 %v59, %v69
    %v71 = vmul.f32 %v70, 64.0
    %v72 = vmul.f32 %v71, 1.442695
    %v73 = vpow.pop %v72
    %v74 = vld [vmem:[#allocation3] sm:$0xff]
    %v75 = vadd.f32 %v73, %v74
    %v76 = vlog2.pop %v75
    %v77 = vmul.f32 %v76, 0.6931472
    %v78 = vsub.f32 %v71, %v77
    %79 = vst.msk [vmem:[%s2] sm:$0xff] %vm42, %v78
  $region17: #{tpu_custom_call.1} parent=0 // pred_fallthru
    _
  // Predicated region
  $region18: #{tpu_custom_call.1} parent=0 // pred_check
    _
  $region19: #{tpu_custom_call.1} parent=0 // pred_check_branch
    %81 = sbr.rel (0) target = $region21
  $region20: #{tpu_custom_call.1} parent=0 // pred_region
    _
  $region21: #{tpu_custom_call.1} parent=0 // pred_fallthru
    _
  // Predicated region
  $region22: #{tpu_custom_call.1} parent=0 // pred_check
    _
  $region23: #{tpu_custom_call.1} parent=0 // pred_check_branch
    %83 = sbr.rel (0) target = $region25
  $region24: #{tpu_custom_call.1} parent=0 // pred_region
    _
  $region25: #{tpu_custom_call.1} parent=0 // pred_fallthru
    _

</llo_original>
